<compile_context>
chip_gen: v6e
topology: v6e:2x2x1
jax: 0.10.0
libtpu: 0.0.40
codegen_flags: <defaults>
</compile_context>

<pallas_src>
import functools

import jax
import jax.numpy as jnp
from jax.experimental import pallas as pl
from jax.experimental.pallas import tpu as pltpu

EPS = 1e-3  # matches eps=0.001 in p_diag / diag


# --------------------------------------------------------------------------------------
# Kernels
# --------------------------------------------------------------------------------------
def _lrpe_plus_fill_kernel(logr_ref, x_ref, theta_ref, scale_ref, sub_ref,
                           real_ref, imag_ref, c_tab, s_tab, *, fold):
    """Large-batch path: build batch-invariant c/s tables once per (head, n-tile).

    CORRECTNESS INVARIANT: the batch axis must be the innermost grid axis and marked
    "arbitrary" so that b == 0 runs first for every (h, nt); otherwise c_tab/s_tab would
    be stale/uninitialized.  Do NOT mark the batch axis "parallel".

    logr_ref  : SMEM f32[H]        log(ratio) per head (negated for the k path)
    x_ref     : VMEM x.dtype[TR,LW] one sequence tile of this (batch, head)
    theta_ref : VMEM f32[1, LW]    this head's theta row (lane-tiled if fold > 1)
    scale_ref : VMEM f32[1, LW]    exp(p)+eps (or its reciprocal), lane-tiled
    sub_ref   : VMEM f32[1, LW]    precomputed lane // D row (folded seq sub-position)
    real_ref, imag_ref : VMEM [TR, LW] outputs
    c_tab, s_tab       : VMEM f32[TR, LW] scratch tables, reused across the batch axis
    """
    h = pl.program_id(0)
    nt = pl.program_id(1)
    b = pl.program_id(2)

    @pl.when(b == 0)
    def _fill_tables():
        tr, lw = c_tab.shape
        row = jax.lax.broadcasted_iota(jnp.float32, (tr, lw), 0)
        base = (nt * tr).astype(jnp.float32)
        # 1-based sequence index; sub_ref is all zeros when fold == 1.
        pos = (base + row) * float(fold) + sub_ref[...] + 1.0

        theta_v = theta_ref[...]            # (1, LW) broadcasts over rows
        scale_v = scale_ref[...]            # (1, LW)
        logr = logr_ref[h]                  # scalar from SMEM

        phi = theta_v * pos                 # theta * index
        r1 = jnp.exp(pos * logr)            # ratio ** index (ratio > 0)
        c_tab[...] = scale_v * (r1 * jnp.cos(phi))
        s_tab[...] = scale_v * (r1 * jnp.sin(phi))

    # Steady-state body: one load, two multiplies, two stores per element vreg.
    x = x_ref[...].astype(jnp.float32)
    real_ref[...] = (x * c_tab[...]).astype(real_ref.dtype)
    imag_ref[...] = (x * s_tab[...]).astype(imag_ref.dtype)


def _lrpe_plus_table_kernel(x_ref, c_ref, s_ref, real_ref, imag_ref):
    """Small-batch path: c/s tables are precomputed in the wrapper and streamed in."""
    x = x_ref[...].astype(jnp.float32)
    real_ref[...] = (x * c_ref[...]).astype(real_ref.dtype)
    imag_ref[...] = (x * s_ref[...]).astype(imag_ref.dtype)


# --------------------------------------------------------------------------------------
# Wrapper helpers
# --------------------------------------------------------------------------------------
def _vmem_budget():
    """Per-generation scoped-VMEM limit and tile budget.

    v7x  : 64 MiB physical  -> limit 32 MiB, budget ~24 MiB
    v5e/6: 128 MiB physical -> limit 64 MiB, budget ~48 MiB
    """
    try:
        cap = int(pltpu.get_tpu_info().vmem_capacity_bytes)
    except Exception:  # pragma: no cover - conservative fallback
        cap = 64 * 1024 * 1024
    limit = min(cap // 2, 64 * 1024 * 1024)
    budget = min((3 * limit) // 4, 48 * 1024 * 1024)
    return limit, budget


def _choose_tile_rows(nr, max_tr):
    """Largest multiple-of-8 tile row count that divides nr and fits the budget."""
    if nr <= max_tr:
        return nr  # full dim -> always a legal block shape
    for t in range(max_tr, 7, -1):
        if t % 8 == 0 and nr % t == 0:
            return t
    # Fallback (rare): ragged last tile; still correct, just masked on the boundary.
    return max(8, (max_tr // 8) * 8)


# --------------------------------------------------------------------------------------
# Forward
# --------------------------------------------------------------------------------------
def lrpe_plus_forward(x, theta, ratio, p, is_q=True, out_dtype=None,
                      table_fill_min_batch=4):
    """Pallas implementation of Lrpe_plus.forward for core_matrix=1, p_matrix=2.

    Returns (real, imag) arrays of shape (B, H, N, D) in `out_dtype` (default: x.dtype).
    Combining into complex64 is intentionally left to the caller (it would double HBM
    traffic here).
    """
    B, H, N, D = x.shape
    x_dtype = jnp.dtype(x.dtype)
    out_dtype = jnp.dtype(x_dtype if out_dtype is None else out_dtype)

    # ---- wrapper-side precompute (O(H*D), essentially free) ----
    scale = jnp.exp(p.astype(jnp.float32)).reshape(H, 1, D) + EPS
    log_ratio = jnp.log(ratio.astype(jnp.float32)).reshape(H)
    if not is_q:
        scale = 1.0 / scale        # x / (exp(p)+eps)  ->  multiply by reciprocal
        log_ratio = -log_ratio     # ratio -> 1/ratio  (theta stays +theta, as in torch)

    # ---- lane-dense layout: fold consecutive sequence positions into lanes if D < 128.
    # Pad N up to a multiple of `fold` (pad sliced off the outputs) so folding always
    # engages and every output store is an unmasked, lane-dense vst.
    fold = 1
    if D < 128 and 128 % D == 0:
        fold = 128 // D
    N_pad = int(pl.cdiv(N, fold)) * fold
    if N_pad != N:
        x = jnp.pad(x, ((0, 0), (0, 0), (0, N_pad - N), (0, 0)))
    LW = fold * D                  # kernel lane width (multiple of 128 when folded)
    NR = N_pad // fold             # kernel row count along the (folded) sequence axis

    # Native-dtype reshape only: no wrapper-side f32 cast of the bulk tensor.
    x_r = x.reshape(B, H, NR, LW)

    theta_t = jnp.tile(theta.astype(jnp.float32).reshape(H, 1, D), (1, 1, fold))
    scale_t = jnp.tile(scale, (1, 1, fold))
    sub_row = (jnp.arange(LW, dtype=jnp.int32) // D).astype(jnp.float32).reshape(1, LW)

    # ---- tile-size selection (VMEM-budget + generation aware) ----
    vmem_limit, budget = _vmem_budget()
    # live working set per row: double-buffered x, 2 double-buffered outputs, 2 f32 tables
    per_row = LW * (2 * x_dtype.itemsize + 4 * out_dtype.itemsize + 4 * 4)
    max_tr = max(8, budget // per_row)
    TR = _choose_tile_rows(NR, max_tr)
    NT = int(pl.cdiv(NR, TR))

    # v7x megacore: make sure both TensorCores get parallel (H, NT) work when possible.
    # (The batch axis must stay "arbitrary" because of the b == 0 table-fill invariant.)
    if H * NT < 2:
        for t in range((TR + 1) // 2, 7, -1):
            if t % 8 == 0 and NR % t == 0:
                TR, NT = t, NR // t
                break

    out_shapes = (jax.ShapeDtypeStruct((B, H, NR, LW), out_dtype),
                  jax.ShapeDtypeStruct((B, H, NR, LW), out_dtype))
    x_spec = pl.BlockSpec((None, None, TR, LW), lambda h, t, b: (b, h, t, 0))
    out_spec = pl.BlockSpec((None, None, TR, LW), lambda h, t, b: (b, h, t, 0))
    compiler_params = pltpu.CompilerParams(
        dimension_semantics=("parallel", "parallel", "arbitrary"),
        vmem_limit_bytes=int(vmem_limit),
    )
    base_bytes = (x_dtype.itemsize + 2 * out_dtype.itemsize) * B * H * N_pad * D

    if B >= table_fill_min_batch:
        # ---- large batch: batch-amortized in-kernel table fill ----
        kernel = functools.partial(_lrpe_plus_fill_kernel, fold=fold)
        cost = pl.CostEstimate(
            flops=int(2 * B * H * N_pad * D + 6 * H * N_pad * D),
            transcendentals=int(3 * H * N_pad * D),
            bytes_accessed=int(base_bytes),
        )
        real, imag = pl.pallas_call(
            kernel,
            out_shape=out_shapes,
            grid=(H, NT, B),
            in_specs=[
                pl.BlockSpec(memory_space=pltpu.MemorySpace.SMEM),          # log(ratio)
                x_spec,                                                      # x tile
                pl.BlockSpec((None, 1, LW), lambda h, t, b: (h, 0, 0)),      # theta row
                pl.BlockSpec((None, 1, LW), lambda h, t, b: (h, 0, 0)),      # scale row
                pl.BlockSpec((1, LW), lambda h, t, b: (0, 0)),               # sub row
            ],
            out_specs=(out_spec, out_spec),
            scratch_shapes=[
                pltpu.VMEM((TR, LW), jnp.float32),   # c_tab
                pltpu.VMEM((TR, LW), jnp.float32),   # s_tab
            ],
            compiler_params=compiler_params,
            cost_estimate=cost,
        )(log_ratio, x_r, theta_t, scale_t, sub_row)
    else:
        # ---- small batch (B <= 3): precompute tables in plain XLA and stream them.
        # The in-kernel sin/cos fill would not amortize over 1-2 batch elements.
        pos = (jnp.arange(NR, dtype=jnp.float32)[:, None] * float(fold)
               + sub_row + 1.0)                                   # (NR, LW)
        phi = theta_t * pos[None]                                 # (H, NR, LW)
        r1 = jnp.exp(pos[None] * log_ratio[:, None, None])        # (H, NR, LW)
        c_tab = scale_t * (r1 * jnp.cos(phi))
        s_tab = scale_t * (r1 * jnp.sin(phi))
        tab_spec = pl.BlockSpec((None, TR, LW), lambda h, t, b: (h, t, 0))
        cost = pl.CostEstimate(
            flops=int(2 * B * H * N_pad * D),
            transcendentals=0,
            bytes_accessed=int(base_bytes + 8 * H * N_pad * D),
        )
        real, imag = pl.pallas_call(
            _lrpe_plus_table_kernel,
            out_shape=out_shapes,
            grid=(H, NT, B),
            in_specs=[x_spec, tab_spec, tab_spec],
            out_specs=(out_spec, out_spec),
            compiler_params=compiler_params,
            cost_estimate=cost,
        )(x_r, c_tab, s_tab)

    real = real.reshape(B, H, N_pad, D)
    imag = imag.reshape(B, H, N_pad, D)
    if N_pad != N:
        real = real[:, :, :N, :]
        imag = imag[:, :, :N, :]
    return real, imag


# --------------------------------------------------------------------------------------
# Parameter construction + pure-JAX reference
# --------------------------------------------------------------------------------------
def init_params(num_heads, embedding_dim, key):
    """Deterministic parameter construction mirroring Lrpe_plus.__init__ (core=1, p=2)."""
    h = jnp.arange(num_heads, dtype=jnp.float32)
    ratio = jax.nn.sigmoid(h / num_heads * 3.0 + 2.0).reshape(num_heads, 1, 1)

    d = embedding_dim
    theta = 10000.0 ** (-2.0 / d * jnp.arange(d, dtype=jnp.float32))
    theta = jnp.tile(theta[None, None, :], (num_heads, 1, 1)).astype(jnp.float32)

    p = jax.random.normal(key, (num_heads, 1, d), dtype=jnp.float32)  # nn.Parameter(randn)
    return ratio, theta, p


def reference(x, theta, ratio, p, is_q=True):
    """Pure-JAX reference reproducing the PyTorch forward semantics (returns real, imag)."""
    B, H, N, D = x.shape
    xf = x.astype(jnp.float32)
    scale = jnp.exp(p) + EPS                                  # (H,1,D)
    xp = xf * scale if is_q else xf / scale
    idx = jnp.arange(1, N + 1, dtype=jnp.float32).reshape(1, 1, N, 1)
    r = ratio if is_q else 1.0 / ratio                        # (H,1,1)
    phi = theta[None] * idx                                   # (1,H,N,D)
    r1 = r[None] ** idx                                       # (1,H,N,1)
    return xp * r1 * jnp.cos(phi), xp * r1 * jnp.sin(phi)


# --------------------------------------------------------------------------------------
# Self-test
# --------------------------------------------------------------------------------------
if __name__ == "__main__":
    key = jax.random.PRNGKey(0)
    kx, kp, kx2 = jax.random.split(key, 3)

    ok = True

    # Case A: small batch (streamed tables), f32 in/out.
    B, H, N, D = 2, 4, 8, 32
    x = jax.random.normal(kx, (B, H, N, D), dtype=jnp.float32)
    ratio, theta, p = init_params(H, D, kp)
    for is_q in (True, False):
        real, imag = lrpe_plus_forward(x, theta, ratio, p, is_q=is_q)
        real, imag = jax.block_until_ready((real, imag))
        ref_r, ref_i = reference(x, theta, ratio, p, is_q=is_q)
        ok &= bool(jnp.allclose(real, ref_r, atol=1e-4, rtol=1e-4))
        ok &= bool(jnp.allclose(imag, ref_i, atol=1e-4, rtol=1e-4))

    # Case B: larger batch (in-kernel table fill), f32 in/out.
    B2 = 4
    x2 = jax.random.normal(kx2, (B2, H, N, D), dtype=jnp.float32)
    for is_q in (True, False):
        real, imag = lrpe_plus_forward(x2, theta, ratio, p, is_q=is_q)
        real, imag = jax.block_until_ready((real, imag))
        ref_r, ref_i = reference(x2, theta, ratio, p, is_q=is_q)
        ok &= bool(jnp.allclose(real, ref_r, atol=1e-4, rtol=1e-4))
        ok &= bool(jnp.allclose(imag, ref_i, atol=1e-4, rtol=1e-4))

    # Case C: N not a multiple of the lane fold -> wrapper pads, output sliced back.
    H3, N3 = 2, 7
    ratio3, theta3, p3 = init_params(H3, D, kp)
    x3 = jax.random.normal(kx, (2, H3, N3, D), dtype=jnp.float32)
    real, imag = lrpe_plus_forward(x3, theta3, ratio3, p3, is_q=True)
    real, imag = jax.block_until_ready((real, imag))
    ref_r, ref_i = reference(x3, theta3, ratio3, p3, is_q=True)
    ok &= bool(jnp.allclose(real, ref_r, atol=1e-4, rtol=1e-4))
    ok &= bool(jnp.allclose(imag, ref_i, atol=1e-4, rtol=1e-4))

    # Case D: bf16 input (no wrapper cast) -> bf16 outputs by default.
    x_bf16 = x.astype(jnp.bfloat16)
    real, imag = lrpe_plus_forward(x_bf16, theta, ratio, p, is_q=True)
    real, imag = jax.block_until_ready((real, imag))
    ref_r, ref_i = reference(x_bf16, theta, ratio, p, is_q=True)
    ok &= real.dtype == jnp.bfloat16 and imag.dtype == jnp.bfloat16
    ok &= bool(jnp.allclose(real.astype(jnp.float32), ref_r, atol=5e-2, rtol=5e-2))
    ok &= bool(jnp.allclose(imag.astype(jnp.float32), ref_i, atol=5e-2, rtol=5e-2))

    assert ok
    print("KERNEL_OK")
</pallas_src>

<mosaic_0001>
module attributes {stable_mosaic.version = 11 : i64} {
  func.func @_lrpe_plus_table_kernel(%arg0: i32, %arg1: i32, %arg2: i32, %arg3: memref<1x1x2x128xf32, #tpu.memory_space<vmem>>, %arg4: memref<1x2x128xf32, #tpu.memory_space<vmem>>, %arg5: memref<1x2x128xf32, #tpu.memory_space<vmem>>, %arg6: memref<1x1x2x128xf32, #tpu.memory_space<vmem>>, %arg7: memref<1x1x2x128xf32, #tpu.memory_space<vmem>>) attributes {dimension_semantics = [#tpu.dimension_semantics<parallel>, #tpu.dimension_semantics<parallel>, #tpu.dimension_semantics<arbitrary>], iteration_bounds = array<i64: 4, 1, 2>, scalar_prefetch = 0 : i64, scratch_operands = 0 : i64, tpu.core_type = #tpu.core_type<tc>, window_params = [{transform_indices = @transform_0, window_bounds = array<i64: 1, 1, 2, 128>}, {transform_indices = @transform_1, window_bounds = array<i64: 1, 2, 128>}, {transform_indices = @transform_2, window_bounds = array<i64: 1, 2, 128>}, {transform_indices = @transform_3, window_bounds = array<i64: 1, 1, 2, 128>}, {transform_indices = @transform_4, window_bounds = array<i64: 1, 1, 2, 128>}]} {
    %c0 = arith.constant 0 : index
    %c0_0 = arith.constant 0 : index
    %c0_1 = arith.constant 0 : index
    %c0_2 = arith.constant 0 : index
    %0 = vector.load %arg3[%c0, %c0_0, %c0_1, %c0_2] : memref<1x1x2x128xf32, #tpu.memory_space<vmem>>, vector<1x1x2x128xf32>
    %1 = vector.shape_cast %0 : vector<1x1x2x128xf32> to vector<2x128xf32>
    %c0_3 = arith.constant 0 : index
    %c0_4 = arith.constant 0 : index
    %c0_5 = arith.constant 0 : index
    %2 = vector.load %arg4[%c0_3, %c0_4, %c0_5] : memref<1x2x128xf32, #tpu.memory_space<vmem>>, vector<1x2x128xf32>
    %3 = vector.shape_cast %2 : vector<1x2x128xf32> to vector<2x128xf32>
    %4 = arith.mulf %1, %3 : vector<2x128xf32>
    %c0_6 = arith.constant 0 : index
    %c0_7 = arith.constant 0 : index
    %c0_8 = arith.constant 0 : index
    %c0_9 = arith.constant 0 : index
    %5 = vector.load %arg6[%c0_6, %c0_7, %c0_8, %c0_9] : memref<1x1x2x128xf32, #tpu.memory_space<vmem>>, vector<1x1x2x128xf32>
    %6 = vector.shape_cast %5 : vector<1x1x2x128xf32> to vector<2x128xf32>
    %7 = vector.shape_cast %4 : vector<2x128xf32> to vector<1x1x2x128xf32>
    tpu.vector_store %arg6[%c0_6, %c0_7, %c0_8, %c0_9], %7 {strides = array<i32>} : memref<1x1x2x128xf32, #tpu.memory_space<vmem>>, vector<1x1x2x128xf32>,
    %c0_10 = arith.constant 0 : index
    %c0_11 = arith.constant 0 : index
    %c0_12 = arith.constant 0 : index
    %8 = vector.load %arg5[%c0_10, %c0_11, %c0_12] : memref<1x2x128xf32, #tpu.memory_space<vmem>>, vector<1x2x128xf32>
    %9 = vector.shape_cast %8 : vector<1x2x128xf32> to vector<2x128xf32>
    %10 = arith.mulf %1, %9 : vector<2x128xf32>
    %c0_13 = arith.constant 0 : index
    %c0_14 = arith.constant 0 : index
    %c0_15 = arith.constant 0 : index
    %c0_16 = arith.constant 0 : index
    %11 = vector.load %arg7[%c0_13, %c0_14, %c0_15, %c0_16] : memref<1x1x2x128xf32, #tpu.memory_space<vmem>>, vector<1x1x2x128xf32>
    %12 = vector.shape_cast %11 : vector<1x1x2x128xf32> to vector<2x128xf32>
    %13 = vector.shape_cast %10 : vector<2x128xf32> to vector<1x1x2x128xf32>
    tpu.vector_store %arg7[%c0_13, %c0_14, %c0_15, %c0_16], %13 {strides = array<i32>} : memref<1x1x2x128xf32, #tpu.memory_space<vmem>>, vector<1x1x2x128xf32>,
    return
  }
  func.func @transform_0(%arg0: i32, %arg1: i32, %arg2: i32) -> (i32, i32, i32, i32) {
    %c0_i32 = arith.constant 0 : i32
    %c0_i32_0 = arith.constant 0 : i32
    return %arg2, %arg0, %arg1, %c0_i32 : i32, i32, i32, i32
  }
  func.func @transform_1(%arg0: i32, %arg1: i32, %arg2: i32) -> (i32, i32, i32) {
    %c0_i32 = arith.constant 0 : i32
    %c0_i32_0 = arith.constant 0 : i32
    return %arg0, %arg1, %c0_i32 : i32, i32, i32
  }
  func.func @transform_2(%arg0: i32, %arg1: i32, %arg2: i32) -> (i32, i32, i32) {
    %c0_i32 = arith.constant 0 : i32
    %c0_i32_0 = arith.constant 0 : i32
    return %arg0, %arg1, %c0_i32 : i32, i32, i32
  }
  func.func @transform_3(%arg0: i32, %arg1: i32, %arg2: i32) -> (i32, i32, i32, i32) {
    %c0_i32 = arith.constant 0 : i32
    %c0_i32_0 = arith.constant 0 : i32
    return %arg2, %arg0, %arg1, %c0_i32 : i32, i32, i32, i32
  }
  func.func @transform_4(%arg0: i32, %arg1: i32, %arg2: i32) -> (i32, i32, i32, i32) {
    %c0_i32 = arith.constant 0 : i32
    %c0_i32_0 = arith.constant 0 : i32
    return %arg2, %arg0, %arg1, %c0_i32 : i32, i32, i32, i32
  }
}

</mosaic_0001>

<llo_original>
// kernel: tpu_custom_call.1
$region0: #{tpu_custom_call.1}
  #allocation0 [shape = 'u32[]', space=smem, size = 0x4, offset = 0x4, fixed_abs, tag = 'smem constant byte address 0x4 - core index']
  #allocation1 [shape = 'u32[144,128]{1,0:T(1,128)}', space=vmem, size = 0x12000, scoped, tag = 'internal scratch']
  %s0 = inlined_call_operand.hbm [shape: f32[2,4,2,128], index: 0, kind: input, shape index: {}]
  %s1 = inlined_call_operand.hbm [shape: f32[4,2,128], index: 1, kind: input, shape index: {}]
  %s2 = inlined_call_operand.hbm [shape: f32[4,2,128], index: 2, kind: input, shape index: {}]
  %s3 = inlined_call_operand.hbm [shape: f32[2,4,2,128], index: 3, kind: output, shape index: {0}]
  %s4 = inlined_call_operand.hbm [shape: f32[2,4,2,128], index: 4, kind: output, shape index: {1}]
  %5 = xla_tuple %s3, %s4
  %s6 = sld [smem:[#allocation0]]
  $region65: #{tpu_custom_call.1} parent=0
    _
  %s8 = ssub.s32 1, %s6
  %s9 = scalar_select 0, %s8, %s6
  $region1: #{tpu_custom_call.1} parent=0
    #allocation2 [shape = 'u8[2048]{0}', space=vmem, size = 0x800, scoped, tag = 'input window, operand 0']
    #allocation3 [shape = 's32[2]{0}', space=sflag, size = 0x8, scoped, tag = 'scoped memory for tpu_custom_call.1']
    #allocation4 [shape = 's32[2]{0}', space=sflag, size = 0x8, scoped, tag = 'scoped memory for tpu_custom_call.1']
    #allocation5 [shape = 'u8[2048]{0}', space=vmem, size = 0x800, scoped, tag = 'input window, operand 1']
    #allocation6 [shape = 's32[2]{0}', space=sflag, size = 0x8, scoped, tag = 'scoped memory for tpu_custom_call.1']
    #allocation7 [shape = 'u8[2048]{0}', space=vmem, size = 0x800, scoped, tag = 'input window, operand 2']
    #allocation8 [shape = 'u8[2048]{0}', space=vmem, size = 0x800, scoped, tag = 'output window, operand 0']
    #allocation9 [shape = 'u8[2048]{0}', space=vmem, size = 0x800, scoped, tag = 'output window, operand 1']
    #allocation10 [shape = 's32[2]{0}', space=sflag, size = 0x8, scoped, tag = 'scoped memory for tpu_custom_call.1']
    %10 = vsyncpa [#allocation3], 0
    %s11 = scalar_lea.sflag [#allocation3], 1
    %12 = vsyncpa %s11, 0
    %13 = vsyncpa [#allocation6], 0
    %s14 = scalar_lea.sflag [#allocation6], 1
    %15 = vsyncpa %s14, 0
    %16 = vsyncpa [#allocation4], 0
    %s17 = scalar_lea.sflag [#allocation4], 1
    %18 = vsyncpa %s17, 0
    %19 = vsyncpa [#allocation10], 0
    %s20 = scalar_lea.sflag [#allocation10], 1
    %21 = vsyncpa %s20, 0
    loop: start=0, step=1, limit=10
    $region2: #{tpu_custom_call.1} parent=1 // loop_pre_header
      _
    $region3: #{tpu_custom_call.1} parent=1 // loop_header
      %s23 = sphi 0, %s27
      %p24 = scmp.ge.s32.totalorder %s23, 10
      %s30 = sphi 0, %s49
      %s31 = sphi 0, %s45
      %s32 = sphi 0, %s41
      %s33 = sphi 0, %s30
      %s34 = sphi 0, %s31
      %s35 = sphi 0, %s32
      %s36 = sphi 0, %s33
      %s37 = sphi 0, %s34
      %s38 = sphi 0, %s35
      %s56 = sphi 0, %s58
      %s59 = sphi 0, %s56
      %s60 = sphi 0, %s59
      %s76 = sphi 0, %s60
      %s84 = sphi 0, %s86
      %s87 = sphi 0, %s84
      %s88 = sphi 0, %s87
      %s104 = sphi 0, %s88
      %s112 = sphi 0, %s114
      %s115 = sphi 0, %s112
      %s116 = sphi 0, %s115
      %s132 = sphi 0, %s116
      %s142 = sphi 0, %s144
      %s145 = sphi 0, %s142
      %s146 = sphi 0, %s145
      %s162 = sphi 0, %s146
      %s172 = sphi 0, %s174
      %s175 = sphi 0, %s172
      %s176 = sphi 0, %s175
      %s192 = sphi 0, %s176
    $region4: #{tpu_custom_call.1} parent=1 // loop_header_branch
      %26 = sbr.rel (%p24) target = $region8
    $region5: #{tpu_custom_call.1} parent=1 // loop_body
      %s28 = ssub.s32 %s23, 1
      %s29 = ssub.s32 %s23, 2
      %s39 = sadd.s32 1, %s32
      %p40 = scmp.ge.s32.totalorder %s39, 2
      %s41 = scalar_select %p40, 0, %s39
      %s42 = sadd.s32 1, %s31
      %s43 = scalar_select %p40, %s42, %s31
      %p44 = scmp.ge.s32.totalorder %s43, 1
      %s45 = scalar_select %p44, 0, %s43
      %s46 = sadd.s32 1, %s30
      %s47 = scalar_select %p44, %s46, %s30
      %p48 = scmp.ge.s32.totalorder %s47, 4
      %s49 = scalar_select %p48, 0, %s47
      %s50 = ssub.s32 %s32, %s41
      %s51 = ssub.s32 %s30, %s49
      %s52 = sor.u32 %s50, %s51
      %s53 = ssub.s32 %s31, %s45
      %s54 = sor.u32 %s52, %s53
      %p55 = scmp.eq.s32.totalorder %s54, 0
      %s57 = sadd.s32 %s56, 1
      %s58 = scalar_select %p55, %s56, %s57
      %p61 = pneg %p55
      %p62 = scmp.eq.s32.totalorder %s23, 7
      %p63 = por %p61, %p62
      %p64 = scmp.ne.s32.totalorder %s56, %s59
      %p65 = scmp.eq.s32.totalorder %s23, 0
      %p66 = por %p64, %p65
      %p67 = scmp.ne.s32.totalorder %s56, %s59
      %p68 = scmp.eq.s32.totalorder %s28, 7
      %p69 = por %p67, %p68
      %p70 = scmp.ne.s32.totalorder %s59, %s60
      %p71 = scmp.eq.s32.totalorder %s28, 0
      %p72 = por %p70, %p71
      %p73 = scmp.ne.s32.totalorder %s59, %s60
      %p74 = scmp.eq.s32.totalorder %s29, 7
      %p75 = por %p73, %p74
      %p77 = scmp.ne.s32.totalorder %s60, %s76
      %p78 = scmp.eq.s32.totalorder %s29, 0
      %p79 = por %p77, %p78
      %s80 = ssub.s32 %s30, %s49
      %s81 = ssub.s32 %s31, %s45
      %s82 = sor.u32 %s80, %s81
      %p83 = scmp.eq.s32.totalorder %s82, 0
      %s85 = sadd.s32 %s84, 1
      %s86 = scalar_select %p83, %s84, %s85
      %p89 = pneg %p83
      %p90 = scmp.eq.s32.totalorder %s23, 7
      %p91 = por %p89, %p90
      %p92 = scmp.ne.s32.totalorder %s84, %s87
      %p93 = scmp.eq.s32.totalorder %s23, 0
      %p94 = por %p92, %p93
      %p95 = scmp.ne.s32.totalorder %s84, %s87
      %p96 = scmp.eq.s32.totalorder %s28, 7
      %p97 = por %p95, %p96
      %p98 = scmp.ne.s32.totalorder %s87, %s88
      %p99 = scmp.eq.s32.totalorder %s28, 0
      %p100 = por %p98, %p99
      %p101 = scmp.ne.s32.totalorder %s87, %s88
      %p102 = scmp.eq.s32.totalorder %s29, 7
      %p103 = por %p101, %p102
      %p105 = scmp.ne.s32.totalorder %s88, %s104
      %p106 = scmp.eq.s32.totalorder %s29, 0
      %p107 = por %p105, %p106
      %s108 = ssub.s32 %s30, %s49
      %s109 = ssub.s32 %s31, %s45
      %s110 = sor.u32 %s108, %s109
      %p111 = scmp.eq.s32.totalorder %s110, 0
      %s113 = sadd.s32 %s112, 1
      %s114 = scalar_select %p111, %s112, %s113
      %p117 = pneg %p111
      %p118 = scmp.eq.s32.totalorder %s23, 7
      %p119 = por %p117, %p118
      %p120 = scmp.ne.s32.totalorder %s112, %s115
      %p121 = scmp.eq.s32.totalorder %s23, 0
      %p122 = por %p120, %p121
      %p123 = scmp.ne.s32.totalorder %s112, %s115
      %p124 = scmp.eq.s32.totalorder %s28, 7
      %p125 = por %p123, %p124
      %p126 = scmp.ne.s32.totalorder %s115, %s116
      %p127 = scmp.eq.s32.totalorder %s28, 0
      %p128 = por %p126, %p127
      %p129 = scmp.ne.s32.totalorder %s115, %s116
      %p130 = scmp.eq.s32.totalorder %s29, 7
      %p131 = por %p129, %p130
      %p133 = scmp.ne.s32.totalorder %s116, %s132
      %p134 = scmp.eq.s32.totalorder %s29, 0
      %p135 = por %p133, %p134
      %s136 = ssub.s32 %s32, %s41
      %s137 = ssub.s32 %s30, %s49
      %s138 = sor.u32 %s136, %s137
      %s139 = ssub.s32 %s31, %s45
      %s140 = sor.u32 %s138, %s139
      %p141 = scmp.eq.s32.totalorder %s140, 0
      %s143 = sadd.s32 %s142, 1
      %s144 = scalar_select %p141, %s142, %s143
      %p147 = pneg %p141
      %p148 = scmp.eq.s32.totalorder %s23, 7
      %p149 = por %p147, %p148
      %p150 = scmp.ne.s32.totalorder %s142, %s145
      %p151 = scmp.eq.s32.totalorder %s23, 0
      %p152 = por %p150, %p151
      %p153 = scmp.ne.s32.totalorder %s142, %s145
      %p154 = scmp.eq.s32.totalorder %s28, 7
      %p155 = por %p153, %p154
      %p156 = scmp.ne.s32.totalorder %s145, %s146
      %p157 = scmp.eq.s32.totalorder %s28, 0
      %p158 = por %p156, %p157
      %p159 = scmp.ne.s32.totalorder %s145, %s146
      %p160 = scmp.eq.s32.totalorder %s29, 7
      %p161 = por %p159, %p160
      %p163 = scmp.ne.s32.totalorder %s146, %s162
      %p164 = scmp.eq.s32.totalorder %s29, 0
      %p165 = por %p163, %p164
      %s166 = ssub.s32 %s32, %s41
      %s167 = ssub.s32 %s30, %s49
      %s168 = sor.u32 %s166, %s167
      %s169 = ssub.s32 %s31, %s45
      %s170 = sor.u32 %s168, %s169
      %p171 = scmp.eq.s32.totalorder %s170, 0
      %s173 = sadd.s32 %s172, 1
      %s174 = scalar_select %p171, %s172, %s173
      %p177 = pneg %p171
      %p178 = scmp.eq.s32.totalorder %s23, 7
      %p179 = por %p177, %p178
      %p180 = scmp.ne.s32.totalorder %s172, %s175
      %p181 = scmp.eq.s32.totalorder %s23, 0
      %p182 = por %p180, %p181
      %p183 = scmp.ne.s32.totalorder %s172, %s175
      %p184 = scmp.eq.s32.totalorder %s28, 7
      %p185 = por %p183, %p184
      %p186 = scmp.ne.s32.totalorder %s175, %s176
      %p187 = scmp.eq.s32.totalorder %s28, 0
      %p188 = por %p186, %p187
      %p189 = scmp.ne.s32.totalorder %s175, %s176
      %p190 = scmp.eq.s32.totalorder %s29, 7
      %p191 = por %p189, %p190
      %p193 = scmp.ne.s32.totalorder %s176, %s192
      %p194 = scmp.eq.s32.totalorder %s29, 0
      %p195 = por %p193, %p194
      %p196 = scmp.le.s32.totalorder 1, %s23
      %p197 = scmp.lt.s32.totalorder %s23, 9
      %p198 = pnand %p196, %p197
      %p199 = pneg %p198
      // Predicated region
      $region9: #{tpu_custom_call.1} parent=5 // pred_check
        _
      $region10: #{tpu_custom_call.1} parent=5 // pred_check_branch
        %201 = sbr.rel (%p198) target = $region12
      $region11: #{tpu_custom_call.1} parent=5 // pred_region
        %s202 = ssub.s32 %s23, 1
      $region12: #{tpu_custom_call.1} parent=5 // pred_fallthru
        _
      %p203 = scmp.lt.s32.totalorder %s23, 8
      // Predicated region
      $region13: #{tpu_custom_call.1} parent=5 // pred_check
        %p204 = pneg %p203
      $region14: #{tpu_custom_call.1} parent=5 // pred_check_branch
        %206 = sbr.rel (%p204) target = $region16
      $region15: #{tpu_custom_call.1} parent=5 // pred_region
        // Predicated region
        $region17: #{tpu_custom_call.1} parent=15 // pred_check
          %p207 = pneg %p66
        $region18: #{tpu_custom_call.1} parent=15 // pred_check_branch
          %209 = sbr.rel (%p207) target = $region20
        $region19: #{tpu_custom_call.1} parent=15 // pred_region
          %s210 = sand.u32 %s56, 1
          %s211 = scalar_lea.sflag [#allocation3], %s210
          %s212 = sand.u32 %s56, 1
          %s213 = smul.addr %s212, 2
          %s214 = scalar_lea.vmem [#allocation2], %s213
          %s216 = ssub.s32 32, 32
          %217 = vsyncadd %s211, %s216
          %s218 = sadd.s32 %s31, %s30
          %s219 = smul.addr %s32, 4
          %s220 = sadd.s32 %s218, %s219
          %s221 = smul.addr %s220, 32
          %s222 = scalar_lea.hbm %s0, %s221
          %s224 = sshll.u32 %s214, 4
          %s225 = int_to_ptr.vmem [resolvable:$true] %s224
          %227 = dma.hbm_to_vmem [thread:$0]  %s222, 32, %s225, %s211
        $region20: #{tpu_custom_call.1} parent=15 // pred_fallthru
          _
        // Predicated region
        $region21: #{tpu_custom_call.1} parent=15 // pred_check
          %p228 = pneg %p94
        $region22: #{tpu_custom_call.1} parent=15 // pred_check_branch
          %230 = sbr.rel (%p228) target = $region24
        $region23: #{tpu_custom_call.1} parent=15 // pred_region
          %s231 = sand.u32 %s23, 1
          %s232 = scalar_lea.sflag [#allocation6], %s231
          %s233 = sand.u32 %s84, 1
          %s234 = smul.addr %s233, 2
          %s235 = scalar_lea.vmem [#allocation5], %s234
          %s237 = ssub.s32 32, 32
          %238 = vsyncadd %s232, %s237
          %s239 = sadd.s32 %s31, %s30
          %s240 = smul.addr %s239, 32
          %s241 = scalar_lea.hbm %s1, %s240
          %s243 = sshll.u32 %s235, 4
          %s244 = int_to_ptr.vmem [resolvable:$true] %s243
          %246 = dma.hbm_to_vmem [thread:$0]  %s241, 32, %s244, %s232
        $region24: #{tpu_custom_call.1} parent=15 // pred_fallthru
          _
        // Predicated region
        $region25: #{tpu_custom_call.1} parent=15 // pred_check
          %p247 = pneg %p122
        $region26: #{tpu_custom_call.1} parent=15 // pred_check_branch
          %249 = sbr.rel (%p247) target = $region28
        $region27: #{tpu_custom_call.1} parent=15 // pred_region
          %s250 = sand.u32 %s23, 1
          %s251 = scalar_lea.sflag [#allocation6], %s250
          %s252 = sand.u32 %s112, 1
          %s253 = smul.addr %s252, 2
          %s254 = scalar_lea.vmem [#allocation7], %s253
          %s256 = ssub.s32 32, 32
          %257 = vsyncadd %s251, %s256
          %s258 = sadd.s32 %s31, %s30
          %s259 = smul.addr %s258, 32
          %s260 = scalar_lea.hbm %s2, %s259
          %s262 = sshll.u32 %s254, 4
          %s263 = int_to_ptr.vmem [resolvable:$true] %s262
          %265 = dma.hbm_to_vmem [thread:$0]  %s260, 32, %s263, %s251
        $region28: #{tpu_custom_call.1} parent=15 // pred_fallthru
          _
      $region16: #{tpu_custom_call.1} parent=5 // pred_fallthru
        _
      %p266 = scmp.le.s32.totalorder 1, %s23
      %p267 = scmp.lt.s32.totalorder %s23, 9
      %p268 = pnand %p266, %p267
      %p269 = pneg %p268
      // Predicated region
      $region29: #{tpu_custom_call.1} parent=5 // pred_check
        _
      $region30: #{tpu_custom_call.1} parent=5 // pred_check_branch
        %271 = sbr.rel (%p268) target = $region32
      $region31: #{tpu_custom_call.1} parent=5 // pred_region
        %s272 = ssub.s32 %s23, 1
        %s273 = sand.u32 %s59, 1
        %s274 = scalar_lea.sflag [#allocation3], %s273
        %s275 = sand.u32 %s59, 1
        %s276 = smul.addr %s275, 2
        %s277 = scalar_lea.vmem [#allocation2], %s276
        // Predicated region
        $region33: #{tpu_custom_call.1} parent=31 // pred_check
          %p278 = pneg %p72
        $region34: #{tpu_custom_call.1} parent=31 // pred_check_branch
          %280 = sbr.rel (%p278) target = $region36
        $region35: #{tpu_custom_call.1} parent=31 // pred_region
          %281 = dma.done %s274, 32
        $region36: #{tpu_custom_call.1} parent=31 // pred_fallthru
          _
        %s282 = sand.u32 %s28, 1
        %s283 = scalar_lea.sflag [#allocation6], %s282
        %s284 = sand.u32 %s87, 1
        %s285 = smul.addr %s284, 2
        %s286 = scalar_lea.vmem [#allocation5], %s285
        // Predicated region
        $region37: #{tpu_custom_call.1} parent=31 // pred_check
          %p287 = pneg %p100
        $region38: #{tpu_custom_call.1} parent=31 // pred_check_branch
          %289 = sbr.rel (%p287) target = $region40
        $region39: #{tpu_custom_call.1} parent=31 // pred_region
          %290 = dma.done %s283, 32
        $region40: #{tpu_custom_call.1} parent=31 // pred_fallthru
          _
        %s291 = sand.u32 %s28, 1
        %s292 = scalar_lea.sflag [#allocation6], %s291
        %s293 = sand.u32 %s115, 1
        %s294 = smul.addr %s293, 2
        %s295 = scalar_lea.vmem [#allocation7], %s294
        // Predicated region
        $region41: #{tpu_custom_call.1} parent=31 // pred_check
          %p296 = pneg %p128
        $region42: #{tpu_custom_call.1} parent=31 // pred_check_branch
          %298 = sbr.rel (%p296) target = $region44
        $region43: #{tpu_custom_call.1} parent=31 // pred_region
          %299 = dma.done %s292, 32
        $region44: #{tpu_custom_call.1} parent=31 // pred_fallthru
          _
        %s300 = sand.u32 %s59, 1
        %s301 = scalar_lea.sflag [#allocation3], %s300
        %s302 = sand.u32 %s59, 1
        %s303 = smul.addr %s302, 2
        %s304 = scalar_lea.vmem [#allocation2], %s303
        %p305 = pneg %p72
        %p306 = pneg %p69
        %s307 = sand.u32 %s28, 1
        %s308 = scalar_lea.sflag [#allocation6], %s307
        %s309 = sand.u32 %s87, 1
        %s310 = smul.addr %s309, 2
        %s311 = scalar_lea.vmem [#allocation5], %s310
        %p312 = pneg %p100
        %p313 = pneg %p97
        %s314 = sand.u32 %s28, 1
        %s315 = scalar_lea.sflag [#allocation6], %s314
        %s316 = sand.u32 %s115, 1
        %s317 = smul.addr %s316, 2
        %s318 = scalar_lea.vmem [#allocation7], %s317
        %p319 = pneg %p128
        %p320 = pneg %p125
        %p321 = pneg %p158
        %p322 = pneg %p155
        %s323 = sand.u32 %s145, 1
        %s324 = scalar_lea.sflag [#allocation4], %s323
        %s325 = sand.u32 %s145, 1
        %s326 = smul.addr %s325, 2
        %s327 = scalar_lea.vmem [#allocation8], %s326
        %p328 = pneg %p188
        %p329 = pneg %p185
        %s330 = sand.u32 %s175, 1
        %s331 = scalar_lea.sflag [#allocation10], %s330
        %s332 = sand.u32 %s175, 1
        %s333 = smul.addr %s332, 2
        %s334 = scalar_lea.vmem [#allocation9], %s333
        %v335 = vld [vmem:[%s277] sm:$0x3]
        %v336 = vld [vmem:[%s286] sm:$0x3]
        %v337 = vmul.f32 %v335, %v336
        %338 = vst [vmem:[%s327] sm:$0x3] %v337
        %v339 = vld [vmem:[%s295] sm:$0x3]
        %v340 = vmul.f32 %v335, %v339
        %341 = vst [vmem:[%s334] sm:$0x3] %v340
        %s342 = sand.u32 %s145, 1
        %s343 = scalar_lea.sflag [#allocation4], %s342
        %s344 = sand.u32 %s145, 1
        %s345 = smul.addr %s344, 2
        %s346 = scalar_lea.vmem [#allocation8], %s345
        %s347 = sand.u32 %s175, 1
        %s348 = scalar_lea.sflag [#allocation10], %s347
        %s349 = sand.u32 %s175, 1
        %s350 = smul.addr %s349, 2
        %s351 = scalar_lea.vmem [#allocation9], %s350
        // Predicated region
        $region45: #{tpu_custom_call.1} parent=31 // pred_check
          %p352 = pneg %p155
        $region46: #{tpu_custom_call.1} parent=31 // pred_check_branch
          %354 = sbr.rel (%p352) target = $region48
        $region47: #{tpu_custom_call.1} parent=31 // pred_region
          %s356 = ssub.s32 32, 32
          %357 = vsyncadd %s343, %s356
          %s358 = sadd.s32 %s34, %s33
          %s359 = smul.addr %s35, 4
          %s360 = sadd.s32 %s358, %s359
          %s361 = smul.addr %s360, 32
          %s362 = scalar_lea.hbm %s3, %s361
          %s364 = sshll.u32 %s346, 4
          %s365 = int_to_ptr.vmem [resolvable:$true] %s364
          %367 = dma.vmem_to_hbm [thread:$0]  %s365, 32, %s362, %s343
        $region48: #{tpu_custom_call.1} parent=31 // pred_fallthru
          _
        // Predicated region
        $region49: #{tpu_custom_call.1} parent=31 // pred_check
          %p368 = pneg %p185
        $region50: #{tpu_custom_call.1} parent=31 // pred_check_branch
          %370 = sbr.rel (%p368) target = $region52
        $region51: #{tpu_custom_call.1} parent=31 // pred_region
          %s372 = ssub.s32 32, 32
          %373 = vsyncadd %s348, %s372
          %s374 = sadd.s32 %s34, %s33
          %s375 = smul.addr %s35, 4
          %s376 = sadd.s32 %s374, %s375
          %s377 = smul.addr %s376, 32
          %s378 = scalar_lea.hbm %s4, %s377
          %s380 = sshll.u32 %s351, 4
          %s381 = int_to_ptr.vmem [resolvable:$true] %s380
          %383 = dma.vmem_to_hbm [thread:$0]  %s381, 32, %s378, %s348
        $region52: #{tpu_custom_call.1} parent=31 // pred_fallthru
          _
      $region32: #{tpu_custom_call.1} parent=5 // pred_fallthru
        _
      %p384 = scmp.le.s32.totalorder 2, %s23
      // Predicated region
      $region53: #{tpu_custom_call.1} parent=5 // pred_check
        %p385 = pneg %p384
      $region54: #{tpu_custom_call.1} parent=5 // pred_check_branch
        %387 = sbr.rel (%p385) target = $region56
      $region55: #{tpu_custom_call.1} parent=5 // pred_region
        %s388 = ssub.s32 %s23, 2
        // Predicated region
        $region57: #{tpu_custom_call.1} parent=55 // pred_check
          %p389 = pneg %p161
        $region58: #{tpu_custom_call.1} parent=55 // pred_check_branch
          %391 = sbr.rel (%p389) target = $region60
        $region59: #{tpu_custom_call.1} parent=55 // pred_region
          %s392 = sand.u32 %s146, 1
          %s393 = scalar_lea.sflag [#allocation4], %s392
          %s394 = sand.u32 %s146, 1
          %s395 = smul.addr %s394, 2
          %s396 = scalar_lea.vmem [#allocation8], %s395
          %397 = dma.done %s393, 32
        $region60: #{tpu_custom_call.1} parent=55 // pred_fallthru
          _
        // Predicated region
        $region61: #{tpu_custom_call.1} parent=55 // pred_check
          %p398 = pneg %p191
        $region62: #{tpu_custom_call.1} parent=55 // pred_check_branch
          %400 = sbr.rel (%p398) target = $region64
        $region63: #{tpu_custom_call.1} parent=55 // pred_region
          %s401 = sand.u32 %s176, 1
          %s402 = scalar_lea.sflag [#allocation10], %s401
          %s403 = sand.u32 %s176, 1
          %s404 = smul.addr %s403, 2
          %s405 = scalar_lea.vmem [#allocation9], %s404
          %406 = dma.done %s402, 32
        $region64: #{tpu_custom_call.1} parent=55 // pred_fallthru
          _
      $region56: #{tpu_custom_call.1} parent=5 // pred_fallthru
        _
    $region6: #{tpu_custom_call.1} parent=1 // loop_footer
      %s27 = sadd.s32 1, %s23
    $region7: #{tpu_custom_call.1} parent=1 // loop_footer_branch
      %22 = sbr.rel target = $region3
    $region8: #{tpu_custom_call.1} parent=1 // loop_exit
      _
    %407 = vsyncpa [#allocation3], 1
    %s408 = scalar_lea.sflag [#allocation3], 1
    %409 = vsyncpa %s408, 1
    %410 = vsyncpa [#allocation6], 1
    %s411 = scalar_lea.sflag [#allocation6], 1
    %412 = vsyncpa %s411, 1
    %413 = vsyncpa [#allocation4], 1
    %s414 = scalar_lea.sflag [#allocation4], 1
    %415 = vsyncpa %s414, 1
    %416 = vsyncpa [#allocation10], 1
    %s417 = scalar_lea.sflag [#allocation10], 1
    %418 = vsyncpa %s417, 1

</llo_original>
